<compile_context>
chip_gen: v7x
topology: tpu7x:2x2x1
jax: 0.10.0
libtpu: 0.0.40
codegen_flags: <defaults>
</compile_context>

<pallas_src>
import functools

import jax
import jax.numpy as jnp
from jax.experimental import pallas as pl
from jax.experimental.pallas import tpu as pltpu


# ---------------------------------------------------------------------------
# Kernels
# ---------------------------------------------------------------------------

def _copy_block_kernel(x_ref, o_ref):
    # VMEM-staged path: input and output blocks cover the same logical
    # columns; any columns past w_out in the last column block are discarded
    # by Pallas' partial-block writeback masking, so this is a pure copy.
    o_ref[...] = x_ref[...]


def _hbm_dma_kernel(x_hbm, o_hbm, sems, *, row_splits, w_out):
    # Direct strided HBM->HBM copy: never stages through VMEM. Each chunk is
    # a (rows_chunk, w_out) rectangle; all chunk DMAs are started before any
    # wait so multiple DMA engines stream concurrently.
    copies = []
    for idx, (r0, rr) in enumerate(row_splits):
        cp = pltpu.make_async_copy(
            x_hbm.at[pl.ds(r0, rr), pl.ds(0, w_out)],
            o_hbm.at[pl.ds(r0, rr), pl.ds(0, w_out)],
            sems.at[idx],
        )
        cp.start()
        copies.append(cp)
    for cp in copies:
        cp.wait()


# ---------------------------------------------------------------------------
# Helpers
# ---------------------------------------------------------------------------

def _sublane_pack(dtype) -> int:
    """Rows per packed vreg sublane group for this dtype (8/16/32)."""
    itemsize = jnp.dtype(dtype).itemsize
    return {4: 8, 2: 16, 1: 32}.get(itemsize, 8)


def _round_up(x: int, m: int) -> int:
    return ((x + m - 1) // m) * m


def _vmem_budget_and_limit():
    """Per-generation (budget, scoped-limit) in bytes.

    128 MiB-VMEM parts (v5e/v6e) get a large budget to amortize per-step
    overhead; 64 MiB parts (v7x) keep the conservative 16/32 MiB split.
    """
    try:
        vmem_bytes = int(pltpu.get_tpu_info().vmem_capacity_bytes)
    except Exception:
        vmem_bytes = 64 * 1024 * 1024  # assume the smallest (v7x per-TC) VMEM
    if vmem_bytes >= 96 * 1024 * 1024:
        return 48 * 1024 * 1024, 96 * 1024 * 1024
    return 16 * 1024 * 1024, 32 * 1024 * 1024


# ---------------------------------------------------------------------------
# Paths
# ---------------------------------------------------------------------------

def _chomp_hbm_dma(x2: jax.Array, w_out: int) -> jax.Array:
    """Strided HBM->HBM copy of columns [0, w_out) of every row."""
    rows, _ = x2.shape

    # Split the row range into a few chunks so several DMAs are in flight.
    num_chunks = max(1, min(4, rows // 8))
    base, rem = divmod(rows, num_chunks)
    row_splits, r0 = [], 0
    for i in range(num_chunks):
        rr = base + (1 if i < rem else 0)
        if rr > 0:
            row_splits.append((r0, rr))
            r0 += rr
    num_chunks = len(row_splits)

    kernel = functools.partial(
        _hbm_dma_kernel, row_splits=tuple(row_splits), w_out=w_out)

    return pl.pallas_call(
        kernel,
        out_shape=jax.ShapeDtypeStruct((rows, w_out), x2.dtype),
        in_specs=[pl.BlockSpec(memory_space=pl.ANY)],
        out_specs=pl.BlockSpec(memory_space=pl.ANY),
        scratch_shapes=[pltpu.SemaphoreType.DMA((num_chunks,))],
        compiler_params=pltpu.CompilerParams(
            # Nothing is staged in VMEM; keep the scoped limit small.
            vmem_limit_bytes=16 * 1024 * 1024,
        ),
    )(x2)


def _chomp_vmem_staged(x2: jax.Array, w_out: int) -> jax.Array:
    """BlockSpec-pipelined VMEM copy (narrow outputs / DMA-path fallback)."""
    rows, w = x2.shape
    dtype = x2.dtype
    itemsize = jnp.dtype(dtype).itemsize
    pack = _sublane_pack(dtype)
    budget, vmem_limit = _vmem_budget_and_limit()

    # Column tile: 128-multiple. Prefer covering all kept columns in one
    # block; tile the width only when even `pack` rows would not fit the
    # (padded) budget (very wide rows).
    w_out_pad = _round_up(w_out, 128)
    if 4 * pack * w_out_pad * itemsize <= budget:
        tile_c = w_out_pad
    else:
        tile_c = max(128, ((budget // (4 * pack * itemsize)) // 128) * 128)
    col_grid = pl.cdiv(w_out, tile_c)

    # Row tile from the budget using the *padded* per-block footprint:
    # (input block + output block) x double-buffering = 4 buffers.
    tile_r = budget // (4 * tile_c * itemsize)
    tile_r = max(pack, (tile_r // pack) * pack)

    if tile_r >= rows:
        if rows >= 4 * pack and col_grid == 1:
            # Keep >= 2 grid steps so input/output DMAs pipeline and the row
            # axis can shard across both TensorCores on v7x.
            tile_r = pack * pl.cdiv(pl.cdiv(rows, 2), pack)
        else:
            tile_r = rows  # full sublane extent: always a legal block dim

    # Input and output blocks index the same logical columns; the last column
    # block may extend past w_out (but block indices never go past the input
    # extent), and Pallas masks the partial output writeback.
    in_spec = pl.BlockSpec((tile_r, tile_c), lambda i, j: (i, j))
    out_spec = pl.BlockSpec((tile_r, tile_c), lambda i, j: (i, j))

    return pl.pallas_call(
        _copy_block_kernel,
        out_shape=jax.ShapeDtypeStruct((rows, w_out), dtype),
        grid_spec=pl.GridSpec(
            grid=(pl.cdiv(rows, tile_r), col_grid),
            in_specs=[in_spec],
            out_specs=out_spec,
        ),
        compiler_params=pltpu.CompilerParams(
            dimension_semantics=("parallel", "parallel"),
            vmem_limit_bytes=vmem_limit,
        ),
    )(x2)


# ---------------------------------------------------------------------------
# Public wrapper (Chomp1d forward)
# ---------------------------------------------------------------------------

def chomp1d(x: jax.Array, chomp_size: int) -> jax.Array:
    """Equivalent of Chomp1d(chomp_size)(x) for a 4-D (N, C, H, W) input."""
    n, c, h, w = x.shape
    assert 0 < chomp_size < w, "chomp_size must be in (0, W)"
    w_out = w - chomp_size

    # Only the last axis is sliced -> (N*C*H, W) is a layout-preserving view
    # of the same copy problem with big, lane-dense row tiles.
    rows = n * c * h
    x2 = x.reshape(rows, w)
    itemsize = jnp.dtype(x.dtype).itemsize

    if w_out * itemsize >= 512:
        # Wide kept region: direct strided HBM->HBM DMA (no VMEM round-trip).
        try:
            out2 = _chomp_hbm_dma(x2, w_out)
            return out2.reshape(n, c, h, w_out)
        except Exception:
            pass  # lowering rejected (e.g. unusual layout) -> staged copy

    # Narrow / fallback path.
    # TODO(synk): for w_out < 128 a wrapper-side repack folding rows into
    # lanes would make the output fully lane-dense (masked-store savings).
    out2 = _chomp_vmem_staged(x2, w_out)
    return out2.reshape(n, c, h, w_out)


# ---------------------------------------------------------------------------
# Self-test
# ---------------------------------------------------------------------------

if __name__ == "__main__":
    key = jax.random.PRNGKey(0)
    k0, k1, k2 = jax.random.split(key, 3)

    # Case 1: small NCHW input, narrow misaligned w_out -> VMEM-staged path.
    x = jax.random.normal(k0, (2, 4, 16, 16), dtype=jnp.float32)
    chomp_size = 3
    out = jax.block_until_ready(chomp1d(x, chomp_size))
    ref = x[:, :, :, :-chomp_size]
    assert out.shape == ref.shape and out.dtype == ref.dtype
    assert jnp.array_equal(out, ref), "Chomp1d mismatch (staged path)"

    # Case 2: 128-lane-aligned w_out -> direct HBM->HBM DMA fast path.
    x_a = jax.random.normal(k1, (2, 4, 8, 256), dtype=jnp.float32)
    chomp_a = 128
    out_a = jax.block_until_ready(chomp1d(x_a, chomp_a))
    ref_a = x_a[:, :, :, :-chomp_a]
    assert out_a.shape == ref_a.shape and out_a.dtype == ref_a.dtype
    assert jnp.array_equal(out_a, ref_a), "Chomp1d mismatch (DMA path)"

    # Case 3: wide but misaligned w_out -> DMA path with automatic fallback.
    x_b = jax.random.normal(k2, (1, 2, 8, 384), dtype=jnp.float32)
    chomp_b = 89
    out_b = jax.block_until_ready(chomp1d(x_b, chomp_b))
    ref_b = x_b[:, :, :, :-chomp_b]
    assert out_b.shape == ref_b.shape and out_b.dtype == ref_b.dtype
    assert jnp.array_equal(out_b, ref_b), "Chomp1d mismatch (wide misaligned)"

    print("KERNEL_OK")
</pallas_src>

<mosaic_0001>
module attributes {stable_mosaic.version = 11 : i64} {
  func.func @_copy_block_kernel(%arg0: i32, %arg1: i32, %arg2: memref<64x128xf32, #tpu.memory_space<vmem>>, %arg3: memref<64x128xf32, #tpu.memory_space<vmem>>) attributes {dimension_semantics = [#tpu.dimension_semantics<parallel>, #tpu.dimension_semantics<parallel>], iteration_bounds = array<i64: 2, 1>, scalar_prefetch = 0 : i64, scratch_operands = 0 : i64, tpu.core_type = #tpu.core_type<tc>, window_params = [{transform_indices = @transform_0, window_bounds = array<i64: 64, 128>}, {transform_indices = @transform_1, window_bounds = array<i64: 64, 128>}]} {
    %c0 = arith.constant 0 : index
    %c0_0 = arith.constant 0 : index
    %0 = vector.load %arg2[%c0, %c0_0] : memref<64x128xf32, #tpu.memory_space<vmem>>, vector<64x128xf32>
    %c0_1 = arith.constant 0 : index
    %c0_2 = arith.constant 0 : index
    %1 = vector.load %arg3[%c0_1, %c0_2] : memref<64x128xf32, #tpu.memory_space<vmem>>, vector<64x128xf32>
    tpu.vector_store %arg3[%c0_1, %c0_2], %0 {strides = array<i32>} : memref<64x128xf32, #tpu.memory_space<vmem>>, vector<64x128xf32>,
    return
  }
  func.func @transform_0(%arg0: i32, %arg1: i32) -> (i32, i32) {
    %c0_i32 = arith.constant 0 : i32
    return %arg0, %arg1 : i32, i32
  }
  func.func @transform_1(%arg0: i32, %arg1: i32) -> (i32, i32) {
    %c0_i32 = arith.constant 0 : i32
    return %arg0, %arg1 : i32, i32
  }
}

</mosaic_0001>

<llo_original>
// kernel: tpu_custom_call.1
$region0: #{tpu_custom_call.1}
  #allocation0 [shape = 'u32[]', space=smem, size = 0x4, offset = 0x4, fixed_abs, tag = 'smem constant byte address 0x4 - core index']
  #allocation1 [shape = 'u32[144,128]{1,0:T(1,128)}', space=vmem, size = 0x12000, scoped, tag = 'internal scratch']
  %s0 = inlined_call_operand.vmem [shape: f32[128,16], index: 0, kind: input, shape index: {}]
  %s1 = inlined_call_operand.vmem [shape: f32[128,13], index: 1, kind: output, shape index: {}]
  %s2 = sld [smem:[#allocation0]]
  $region37: #{tpu_custom_call.1} parent=0
    _
  %s4 = ssub.s32 1, %s2
  %s5 = scalar_select 0, %s4, %s2
  loop: start=0, step=1, limit=4
  $region2: #{tpu_custom_call.1} parent=0 // loop_pre_header
    _
  $region3: #{tpu_custom_call.1} parent=0 // loop_header
    %s7 = sphi 0, %s11
    %p8 = scmp.ge.s32.totalorder %s7, 4
    %s14 = sphi 0, %s26
    %s15 = sphi 0, %s22
    %s16 = sphi 0, %s14
    %s17 = sphi 0, %s15
    %s18 = sphi 0, %s16
    %s19 = sphi 0, %s17
    %s31 = sphi 0, %s33
    %s34 = sphi 0, %s31
    %s35 = sphi 0, %s34
    %s51 = sphi 0, %s35
    %s59 = sphi 0, %s61
    %s62 = sphi 0, %s59
    %s63 = sphi 0, %s62
    %s79 = sphi 0, %s63
  $region4: #{tpu_custom_call.1} parent=0 // loop_header_branch
    %10 = sbr.rel (%p8) target = $region8
  $region5: #{tpu_custom_call.1} parent=0 // loop_body
    %s12 = ssub.s32 %s7, 1
    %s13 = ssub.s32 %s7, 2
    %s20 = sadd.s32 1, %s15
    %p21 = scmp.ge.s32.totalorder %s20, 1
    %s22 = scalar_select %p21, 0, %s20
    %s23 = sadd.s32 1, %s14
    %s24 = scalar_select %p21, %s23, %s14
    %p25 = scmp.ge.s32.totalorder %s24, 2
    %s26 = scalar_select %p25, 0, %s24
    %s27 = ssub.s32 %s14, %s26
    %s28 = ssub.s32 %s15, %s22
    %s29 = sor.u32 %s27, %s28
    %p30 = scmp.eq.s32.totalorder %s29, 0
    %s32 = sadd.s32 %s31, 1
    %s33 = scalar_select %p30, %s31, %s32
    %p36 = pneg %p30
    %p37 = scmp.eq.s32.totalorder %s7, 1
    %p38 = por %p36, %p37
    %p39 = scmp.ne.s32.totalorder %s31, %s34
    %p40 = scmp.eq.s32.totalorder %s7, 0
    %p41 = por %p39, %p40
    %p42 = scmp.ne.s32.totalorder %s31, %s34
    %p43 = scmp.eq.s32.totalorder %s12, 1
    %p44 = por %p42, %p43
    %p45 = scmp.ne.s32.totalorder %s34, %s35
    %p46 = scmp.eq.s32.totalorder %s12, 0
    %p47 = por %p45, %p46
    %p48 = scmp.ne.s32.totalorder %s34, %s35
    %p49 = scmp.eq.s32.totalorder %s13, 1
    %p50 = por %p48, %p49
    %p52 = scmp.ne.s32.totalorder %s35, %s51
    %p53 = scmp.eq.s32.totalorder %s13, 0
    %p54 = por %p52, %p53
    %s55 = ssub.s32 %s14, %s26
    %s56 = ssub.s32 %s15, %s22
    %s57 = sor.u32 %s55, %s56
    %p58 = scmp.eq.s32.totalorder %s57, 0
    %s60 = sadd.s32 %s59, 1
    %s61 = scalar_select %p58, %s59, %s60
    %p64 = pneg %p58
    %p65 = scmp.eq.s32.totalorder %s7, 1
    %p66 = por %p64, %p65
    %p67 = scmp.ne.s32.totalorder %s59, %s62
    %p68 = scmp.eq.s32.totalorder %s7, 0
    %p69 = por %p67, %p68
    %p70 = scmp.ne.s32.totalorder %s59, %s62
    %p71 = scmp.eq.s32.totalorder %s12, 1
    %p72 = por %p70, %p71
    %p73 = scmp.ne.s32.totalorder %s62, %s63
    %p74 = scmp.eq.s32.totalorder %s12, 0
    %p75 = por %p73, %p74
    %p76 = scmp.ne.s32.totalorder %s62, %s63
    %p77 = scmp.eq.s32.totalorder %s13, 1
    %p78 = por %p76, %p77
    %p80 = scmp.ne.s32.totalorder %s63, %s79
    %p81 = scmp.eq.s32.totalorder %s13, 0
    %p82 = por %p80, %p81
    %p83 = scmp.le.s32.totalorder 1, %s7
    %p84 = scmp.lt.s32.totalorder %s7, 3
    %p85 = pnand %p83, %p84
    %p86 = pneg %p85
    // Predicated region
    $region9: #{tpu_custom_call.1} parent=5 // pred_check
      _
    $region10: #{tpu_custom_call.1} parent=5 // pred_check_branch
      %88 = sbr.rel (%p85) target = $region12
    $region11: #{tpu_custom_call.1} parent=5 // pred_region
      %s89 = ssub.s32 %s7, 1
    $region12: #{tpu_custom_call.1} parent=5 // pred_fallthru
      _
    %p90 = scmp.lt.s32.totalorder %s7, 2
    // Predicated region
    $region13: #{tpu_custom_call.1} parent=5 // pred_check
      %p91 = pneg %p90
    $region14: #{tpu_custom_call.1} parent=5 // pred_check_branch
      %93 = sbr.rel (%p91) target = $region16
    $region15: #{tpu_custom_call.1} parent=5 // pred_region
      // Predicated region
      $region17: #{tpu_custom_call.1} parent=15 // pred_check
        %p94 = pneg %p41
      $region18: #{tpu_custom_call.1} parent=15 // pred_check_branch
        %96 = sbr.rel (%p94) target = $region20
      $region19: #{tpu_custom_call.1} parent=15 // pred_region
        %s97 = smul.u32 8, %s14
        %p98 = scmp.lt.s32.totalorder %s97, 15
        %s99 = scalar_select %p98, %s97, 15
        %p100 = scmp.lt.s32.totalorder %s15, 0
        %s101 = scalar_select %p100, %s15, 0
        %s102 = sadd.s32 %s101, %s99
        %s103 = smul.addr %s102, 8
        %s104 = scalar_lea.vmem %s0, %s103
        %s105 = smul.u32 8, %s14
      $region20: #{tpu_custom_call.1} parent=15 // pred_fallthru
        _
    $region16: #{tpu_custom_call.1} parent=5 // pred_fallthru
      _
    %p106 = scmp.le.s32.totalorder 1, %s7
    %p107 = scmp.lt.s32.totalorder %s7, 3
    %p108 = pnand %p106, %p107
    %p109 = pneg %p108
    // Predicated region
    $region21: #{tpu_custom_call.1} parent=5 // pred_check
      _
    $region22: #{tpu_custom_call.1} parent=5 // pred_check_branch
      %111 = sbr.rel (%p108) target = $region24
    $region23: #{tpu_custom_call.1} parent=5 // pred_region
      %s112 = ssub.s32 %s7, 1
      %s113 = smul.u32 8, %s16
      %p114 = scmp.lt.s32.totalorder %s113, 15
      %s115 = scalar_select %p114, %s113, 15
      %p116 = scmp.lt.s32.totalorder %s17, 0
      %s117 = scalar_select %p116, %s17, 0
      %s118 = sadd.s32 %s117, %s115
      %s119 = smul.addr %s118, 8
      %s120 = scalar_lea.vmem %s0, %s119
      %p121 = pneg %p47
      %p122 = pneg %p44
      %p123 = pneg %p75
      %p124 = pneg %p72
      %s125 = smul.u32 8, %s16
      %p126 = scmp.lt.s32.totalorder %s125, 15
      %s127 = scalar_select %p126, %s125, 15
      %p128 = scmp.lt.s32.totalorder %s17, 0
      %s129 = scalar_select %p128, %s17, 0
      %s130 = sadd.s32 %s129, %s127
      %s131 = smul.addr %s130, 8
      %s132 = scalar_lea.vmem %s1, %s131
      %s133 = smul.u32 8, %s16
      %p134 = scmp.lt.s32.totalorder %s133, 15
      %s135 = scalar_select %p134, %s133, 15
      %p136 = scmp.lt.s32.totalorder %s17, 0
      %s137 = scalar_select %p136, %s17, 0
      %s138 = sadd.s32 %s137, %s135
      %s139 = smul.addr %s138, 8
      %s140 = scalar_lea.vmem %s0, %s139
      %s141 = smul.u32 8, %s16
      %s142 = smul.u32 8, %s16
      %p143 = scmp.lt.s32.totalorder %s142, 15
      %s144 = scalar_select %p143, %s142, 15
      %p145 = scmp.lt.s32.totalorder %s17, 0
      %s146 = scalar_select %p145, %s17, 0
      %s147 = sadd.s32 %s146, %s144
      %s148 = smul.addr %s147, 8
      %s149 = scalar_lea.vmem %s1, %s148
      %s150 = smul.u32 8, %s16
      %v151 = vld [vmem:[%s140] sm:$0xff]
      %v152 = vld [vmem:[%s140 + $0x8] sm:$0xff]
      %v153 = vld [vmem:[%s140 + $0x10] sm:$0xff]
      %v154 = vld [vmem:[%s140 + $0x18] sm:$0xff]
      %v155 = vld [vmem:[%s140 + $0x20] sm:$0xff]
      %v156 = vld [vmem:[%s140 + $0x28] sm:$0xff]
      %v157 = vld [vmem:[%s140 + $0x30] sm:$0xff]
      %v158 = vld [vmem:[%s140 + $0x38] sm:$0xff]
      %159 = vst [vmem:[%s149] sm:$0xff] %v151
      %160 = vst [vmem:[%s149 + $0x8] sm:$0xff] %v152
      %161 = vst [vmem:[%s149 + $0x10] sm:$0xff] %v153
      %162 = vst [vmem:[%s149 + $0x18] sm:$0xff] %v154
      %163 = vst [vmem:[%s149 + $0x20] sm:$0xff] %v155
      %164 = vst [vmem:[%s149 + $0x28] sm:$0xff] %v156
      %165 = vst [vmem:[%s149 + $0x30] sm:$0xff] %v157
      %166 = vst [vmem:[%s149 + $0x38] sm:$0xff] %v158
      %s167 = smul.u32 8, %s16
      %p168 = scmp.lt.s32.totalorder %s167, 15
      %s169 = scalar_select %p168, %s167, 15
      %p170 = scmp.lt.s32.totalorder %s17, 0
      %s171 = scalar_select %p170, %s17, 0
      %s172 = sadd.s32 %s171, %s169
      %s173 = smul.addr %s172, 8
      %s174 = scalar_lea.vmem %s1, %s173
      // Predicated region
      $region25: #{tpu_custom_call.1} parent=23 // pred_check
        %p175 = pneg %p72
      $region26: #{tpu_custom_call.1} parent=23 // pred_check_branch
        %177 = sbr.rel (%p175) target = $region28
      $region27: #{tpu_custom_call.1} parent=23 // pred_region
        %s178 = smul.u32 8, %s16
      $region28: #{tpu_custom_call.1} parent=23 // pred_fallthru
        _
    $region24: #{tpu_custom_call.1} parent=5 // pred_fallthru
      _
    %p179 = scmp.le.s32.totalorder 2, %s7
    // Predicated region
    $region29: #{tpu_custom_call.1} parent=5 // pred_check
      %p180 = pneg %p179
    $region30: #{tpu_custom_call.1} parent=5 // pred_check_branch
      %182 = sbr.rel (%p180) target = $region32
    $region31: #{tpu_custom_call.1} parent=5 // pred_region
      %s183 = ssub.s32 %s7, 2
      // Predicated region
      $region33: #{tpu_custom_call.1} parent=31 // pred_check
        %p184 = pneg %p78
      $region34: #{tpu_custom_call.1} parent=31 // pred_check_branch
        %186 = sbr.rel (%p184) target = $region36
      $region35: #{tpu_custom_call.1} parent=31 // pred_region
        %s187 = smul.u32 8, %s18
        %p188 = scmp.lt.s32.totalorder %s187, 15
        %s189 = scalar_select %p188, %s187, 15
        %p190 = scmp.lt.s32.totalorder %s19, 0
        %s191 = scalar_select %p190, %s19, 0
        %s192 = sadd.s32 %s191, %s189
        %s193 = smul.addr %s192, 8
        %s194 = scalar_lea.vmem %s1, %s193
      $region36: #{tpu_custom_call.1} parent=31 // pred_fallthru
        _
    $region32: #{tpu_custom_call.1} parent=5 // pred_fallthru
      _
  $region6: #{tpu_custom_call.1} parent=0 // loop_footer
    %s11 = sadd.s32 1, %s7
  $region7: #{tpu_custom_call.1} parent=0 // loop_footer_branch
    %6 = sbr.rel target = $region3
  $region8: #{tpu_custom_call.1} parent=0 // loop_exit
    _

</llo_original>
